<compile_context>
chip_gen: v5e
topology: v5e:2x2
jax: 0.10.0
libtpu: 0.0.40
codegen_flags: <defaults>
</compile_context>

<pallas_src>
import jax
import jax.numpy as jnp
import numpy as np
from jax.experimental import pallas as pl
from jax.experimental.pallas import tpu as pltpu


def _round_up(x, m):
    return (x + m - 1) // m * m


def critic_kernel(s_ref, a_ref, w1s_ref, w1a_ref, w2_ref, w3_ref, b_ref, o_ref):
    # fc1: state @ W1_s + action @ W1_a + b1, relu  (MXU, f32 accumulate)
    h1 = jnp.dot(s_ref[...], w1s_ref[...], preferred_element_type=jnp.float32)
    h1 = h1 + jnp.dot(a_ref[...], w1a_ref[...], preferred_element_type=jnp.float32)
    h1 = jnp.maximum(h1 + b_ref[0:1, :], 0.0)

    # fc2 (MXU, bf16-or-f32 operands, f32 accumulate)
    h2 = jnp.dot(h1.astype(w2_ref.dtype), w2_ref[...],
                 preferred_element_type=jnp.float32)
    h2 = jnp.maximum(h2 + b_ref[1:2, :], 0.0)

    # fc3 (output width 1): VPU multiply + XLU lane reduce.
    w3_row = w3_ref[...].astype(jnp.float32)             # (1, H)
    q = jnp.sum(h2 * w3_row, axis=-1, keepdims=True)     # (TB, 1)
    o_ref[...] = (q + b_ref[2:3, 0:1]).astype(o_ref.dtype)


def critic_forward(state, action, params, *, compute_dtype=jnp.float32,
                   block_b=None):
    """state: (B, S), action: (B, A)  ->  (B, 1) float32."""
    w1s, w1a, w2, w3, b_packed = params
    B, S = state.shape
    A = action.shape[1]
    H = w2.shape[0]

    # Batch tile: multiple of 8 sublanes. Large tiles amortize per-step
    # overhead; VMEM cost is negligible at these feature widths.
    if block_b is None:
        block_b = 1024 if B >= 1024 else _round_up(B, 8)
    TB = int(block_b)
    B_pad = _round_up(B, TB)

    cd = jnp.dtype(compute_dtype)
    state_c = state.astype(cd)
    action_c = action.astype(cd)
    w1s_c, w1a_c, w2_c, w3_c = (x.astype(cd) for x in (w1s, w1a, w2, w3))
    b_f32 = b_packed.astype(jnp.float32)          # biases stay f32 (v5e VPU)

    if B_pad != B:
        state_c = jnp.pad(state_c, ((0, B_pad - B), (0, 0)))
        action_c = jnp.pad(action_c, ((0, B_pad - B), (0, 0)))

    grid = (B_pad // TB,)

    itm = cd.itemsize
    flops = 2 * B_pad * (S * H + A * H + H * H + H)
    bytes_accessed = (B_pad * (S + A) * itm                    # activations in
                      + (S * H + A * H + H * H + H) * itm      # weights
                      + 3 * H * 4                              # biases
                      + B_pad * 4)                             # output
    cost = pl.CostEstimate(flops=flops, transcendentals=0,
                           bytes_accessed=int(bytes_accessed))

    resident = lambda shape: pl.BlockSpec(shape, lambda i: (0, 0))

    out = pl.pallas_call(
        critic_kernel,
        out_shape=jax.ShapeDtypeStruct((B_pad, 1), jnp.float32),
        grid=grid,
        in_specs=[
            pl.BlockSpec((TB, S), lambda i: (i, 0)),   # state tile (pipelined)
            pl.BlockSpec((TB, A), lambda i: (i, 0)),   # action tile (pipelined)
            resident((S, H)),                          # W1_state
            resident((A, H)),                          # W1_action
            resident((H, H)),                          # W2
            resident((1, H)),                          # W3 as a row
            resident((3, H)),                          # packed biases (f32)
        ],
        out_specs=pl.BlockSpec((TB, 1), lambda i: (i, 0)),
        compiler_params=pltpu.CompilerParams(
            dimension_semantics=("parallel",)),
        cost_estimate=cost,
    )(state_c, action_c, w1s_c, w1a_c, w2_c, w3_c, b_f32)

    return out[:B]


def init_params(key, state_size, action_size, hidden_size=32):
    """Deterministic init mirroring Critic.reset_parameters().

    hidden_init() uses weight.size()[0] (= out_features) as "fan_in", so
    lim = 1/sqrt(hidden_size) for fc1/fc2; fc3 weights are U(-3e-3, 3e-3).
    Biases use PyTorch's default Linear range U(-1/sqrt(in_features), ...).
    Weights are stored transposed (in, out); W1 is split into state/action
    halves; biases are packed into one (3, H) array (b1, b2, broadcast b3).
    """
    in1 = state_size + action_size
    ks = jax.random.split(key, 6)
    lim12 = 1.0 / np.sqrt(hidden_size)

    w1 = jax.random.uniform(ks[0], (in1, hidden_size), jnp.float32, -lim12, lim12)
    w1_s, w1_a = w1[:state_size], w1[state_size:]
    b1 = jax.random.uniform(ks[1], (hidden_size,), jnp.float32,
                            -1.0 / np.sqrt(in1), 1.0 / np.sqrt(in1))
    w2 = jax.random.uniform(ks[2], (hidden_size, hidden_size), jnp.float32,
                            -lim12, lim12)
    b2 = jax.random.uniform(ks[3], (hidden_size,), jnp.float32,
                            -1.0 / np.sqrt(hidden_size), 1.0 / np.sqrt(hidden_size))
    w3_row = jax.random.uniform(ks[4], (1, hidden_size), jnp.float32, -3e-3, 3e-3)
    b3 = jax.random.uniform(ks[5], (), jnp.float32,
                            -1.0 / np.sqrt(hidden_size), 1.0 / np.sqrt(hidden_size))
    b_packed = jnp.stack([b1, b2, jnp.full((hidden_size,), b3)], axis=0)  # (3,H)
    return (w1_s, w1_a, w2, w3_row, b_packed)


def critic_ref(state, action, params):
    """Pure-JAX reference for validation."""
    w1s, w1a, w2, w3, b = params
    h1 = jax.nn.relu(state @ w1s + action @ w1a + b[0])
    h2 = jax.nn.relu(h1 @ w2 + b[1])
    return h2 @ w3.T + b[2, 0]


if __name__ == "__main__":
    STATE_SIZE, ACTION_SIZE, HIDDEN = 16, 8, 32

    key = jax.random.PRNGKey(0)
    kp, ks1, ka1, ks2, ka2 = jax.random.split(key, 5)
    params = init_params(kp, STATE_SIZE, ACTION_SIZE, HIDDEN)

    # 1) Small batch (single grid step).
    B1 = 4
    state1 = jax.random.normal(ks1, (B1, STATE_SIZE), jnp.float32)
    action1 = jax.random.normal(ka1, (B1, ACTION_SIZE), jnp.float32)
    out1 = jax.block_until_ready(critic_forward(state1, action1, params))
    ref1 = critic_ref(state1, action1, params)
    np.testing.assert_allclose(np.asarray(out1), np.asarray(ref1),
                               rtol=1e-4, atol=1e-4)
    assert out1.shape == (B1, 1)

    # 2) Larger, non-multiple batch: exercises the batch grid + tail padding.
    B2 = 300
    state2 = jax.random.normal(ks2, (B2, STATE_SIZE), jnp.float32)
    action2 = jax.random.normal(ka2, (B2, ACTION_SIZE), jnp.float32)
    out2 = jax.block_until_ready(
        critic_forward(state2, action2, params, block_b=128))
    ref2 = critic_ref(state2, action2, params)
    np.testing.assert_allclose(np.asarray(out2), np.asarray(ref2),
                               rtol=1e-4, atol=1e-4)
    assert out2.shape == (B2, 1)

    # 3) bf16 operand path (v6e/v7x): f32 accumulation, loose tolerance.
    out3 = jax.block_until_ready(
        critic_forward(state2, action2, params,
                       compute_dtype=jnp.bfloat16, block_b=128))
    np.testing.assert_allclose(np.asarray(out3), np.asarray(ref2),
                               rtol=5e-2, atol=2e-2)

    print("KERNEL_OK")
</pallas_src>

<mosaic_0001>
module attributes {stable_mosaic.version = 11 : i64} {
  func.func @critic_kernel(%arg0: i32, %arg1: memref<8x16xf32, #tpu.memory_space<vmem>>, %arg2: memref<8x8xf32, #tpu.memory_space<vmem>>, %arg3: memref<16x32xf32, #tpu.memory_space<vmem>>, %arg4: memref<8x32xf32, #tpu.memory_space<vmem>>, %arg5: memref<32x32xf32, #tpu.memory_space<vmem>>, %arg6: memref<1x32xf32, #tpu.memory_space<vmem>>, %arg7: memref<3x32xf32, #tpu.memory_space<vmem>>, %arg8: memref<8x1xf32, #tpu.memory_space<vmem>>) attributes {dimension_semantics = [#tpu.dimension_semantics<parallel>], iteration_bounds = array<i64: 1>, scalar_prefetch = 0 : i64, scratch_operands = 0 : i64, tpu.core_type = #tpu.core_type<tc>, window_params = [{transform_indices = @transform_0, window_bounds = array<i64: 8, 16>}, {transform_indices = @transform_1, window_bounds = array<i64: 8, 8>}, {pipeline_mode = #tpu.pipeline_mode<synchronous>, transform_indices = @transform_2, window_bounds = array<i64: 16, 32>}, {pipeline_mode = #tpu.pipeline_mode<synchronous>, transform_indices = @transform_3, window_bounds = array<i64: 8, 32>}, {pipeline_mode = #tpu.pipeline_mode<synchronous>, transform_indices = @transform_4, window_bounds = array<i64: 32, 32>}, {pipeline_mode = #tpu.pipeline_mode<synchronous>, transform_indices = @transform_5, window_bounds = array<i64: 1, 32>}, {pipeline_mode = #tpu.pipeline_mode<synchronous>, transform_indices = @transform_6, window_bounds = array<i64: 3, 32>}, {transform_indices = @transform_7, window_bounds = array<i64: 8, 1>}]} {
    %c0 = arith.constant 0 : index
    %c0_0 = arith.constant 0 : index
    %0 = vector.load %arg1[%c0, %c0_0] : memref<8x16xf32, #tpu.memory_space<vmem>>, vector<8x16xf32>
    %c0_1 = arith.constant 0 : index
    %c0_2 = arith.constant 0 : index
    %1 = vector.load %arg3[%c0_1, %c0_2] : memref<16x32xf32, #tpu.memory_space<vmem>>, vector<16x32xf32>
    %cst = arith.constant dense<0.000000e+00> : vector<8x32xf32>
    %2 = tpu.matmul %0, %1, %cst {dimension_numbers = #tpu.dot_dimension_numbers<[1], [0], [0], [1], [0, 0, 1, 1], [], []>} : vector<8x16xf32>, vector<16x32xf32>, vector<8x32xf32> -> vector<8x32xf32>
    %c0_3 = arith.constant 0 : index
    %c0_4 = arith.constant 0 : index
    %3 = vector.load %arg2[%c0_3, %c0_4] : memref<8x8xf32, #tpu.memory_space<vmem>>, vector<8x8xf32>
    %c0_5 = arith.constant 0 : index
    %c0_6 = arith.constant 0 : index
    %4 = vector.load %arg4[%c0_5, %c0_6] : memref<8x32xf32, #tpu.memory_space<vmem>>, vector<8x32xf32>
    %cst_7 = arith.constant dense<0.000000e+00> : vector<8x32xf32>
    %5 = tpu.matmul %3, %4, %cst_7 {dimension_numbers = #tpu.dot_dimension_numbers<[1], [0], [0], [1], [0, 0, 1, 1], [], []>} : vector<8x8xf32>, vector<8x32xf32>, vector<8x32xf32> -> vector<8x32xf32>
    %6 = arith.addf %2, %5 : vector<8x32xf32>
    %c0_8 = arith.constant 0 : index
    %c0_9 = arith.constant 0 : index
    %7 = vector.load %arg7[%c0_8, %c0_9] : memref<3x32xf32, #tpu.memory_space<vmem>>, vector<1x32xf32>
    %8 = vector.broadcast %7 : vector<1x32xf32> to vector<8x32xf32>
    %9 = arith.addf %6, %8 : vector<8x32xf32>
    %cst_10 = arith.constant 0.000000e+00 : f32
    %10 = vector.broadcast %cst_10 : f32 to vector<8x32xf32>
    %11 = arith.maximumf %9, %10 : vector<8x32xf32>
    %c0_11 = arith.constant 0 : index
    %c0_12 = arith.constant 0 : index
    %12 = vector.load %arg5[%c0_11, %c0_12] : memref<32x32xf32, #tpu.memory_space<vmem>>, vector<32x32xf32>
    %cst_13 = arith.constant dense<0.000000e+00> : vector<8x32xf32>
    %13 = tpu.matmul %11, %12, %cst_13 {dimension_numbers = #tpu.dot_dimension_numbers<[1], [0], [0], [1], [0, 0, 1, 1], [], []>} : vector<8x32xf32>, vector<32x32xf32>, vector<8x32xf32> -> vector<8x32xf32>
    %c1 = arith.constant 1 : index
    %c0_14 = arith.constant 0 : index
    %14 = vector.load %arg7[%c1, %c0_14] : memref<3x32xf32, #tpu.memory_space<vmem>>, vector<1x32xf32>
    %15 = vector.broadcast %14 : vector<1x32xf32> to vector<8x32xf32>
    %16 = arith.addf %13, %15 : vector<8x32xf32>
    %cst_15 = arith.constant 0.000000e+00 : f32
    %17 = vector.broadcast %cst_15 : f32 to vector<8x32xf32>
    %18 = arith.maximumf %16, %17 : vector<8x32xf32>
    %c0_16 = arith.constant 0 : index
    %c0_17 = arith.constant 0 : index
    %19 = vector.load %arg6[%c0_16, %c0_17] : memref<1x32xf32, #tpu.memory_space<vmem>>, vector<1x32xf32>
    %20 = vector.broadcast %19 : vector<1x32xf32> to vector<8x32xf32>
    %21 = arith.mulf %18, %20 : vector<8x32xf32>
    %cst_18 = arith.constant dense<0.000000e+00> : vector<8xf32>
    %22 = vector.multi_reduction <add>, %21, %cst_18 [1] : vector<8x32xf32> to vector<8xf32>
    %23 = vector.shape_cast %22 : vector<8xf32> to vector<8x1xf32>
    %c2 = arith.constant 2 : index
    %c0_19 = arith.constant 0 : index
    %24 = vector.load %arg7[%c2, %c0_19] : memref<3x32xf32, #tpu.memory_space<vmem>>, vector<1x1xf32>
    %25 = vector.broadcast %24 : vector<1x1xf32> to vector<8x1xf32>
    %26 = arith.addf %23, %25 : vector<8x1xf32>
    %c0_20 = arith.constant 0 : index
    %c0_21 = arith.constant 0 : index
    %27 = vector.load %arg8[%c0_20, %c0_21] : memref<8x1xf32, #tpu.memory_space<vmem>>, vector<8x1xf32>
    tpu.vector_store %arg8[%c0_20, %c0_21], %26 {strides = array<i32>} : memref<8x1xf32, #tpu.memory_space<vmem>>, vector<8x1xf32>,
    return
  }
  func.func @transform_0(%arg0: i32) -> (i32, i32) {
    %c0_i32 = arith.constant 0 : i32
    %c0_i32_0 = arith.constant 0 : i32
    return %arg0, %c0_i32 : i32, i32
  }
  func.func @transform_1(%arg0: i32) -> (i32, i32) {
    %c0_i32 = arith.constant 0 : i32
    %c0_i32_0 = arith.constant 0 : i32
    return %arg0, %c0_i32 : i32, i32
  }
  func.func @transform_2(%arg0: i32) -> (i32, i32) {
    %c0_i32 = arith.constant 0 : i32
    %c0_i32_0 = arith.constant 0 : i32
    %c0_i32_1 = arith.constant 0 : i32
    return %c0_i32, %c0_i32_0 : i32, i32
  }
  func.func @transform_3(%arg0: i32) -> (i32, i32) {
    %c0_i32 = arith.constant 0 : i32
    %c0_i32_0 = arith.constant 0 : i32
    %c0_i32_1 = arith.constant 0 : i32
    return %c0_i32, %c0_i32_0 : i32, i32
  }
  func.func @transform_4(%arg0: i32) -> (i32, i32) {
    %c0_i32 = arith.constant 0 : i32
    %c0_i32_0 = arith.constant 0 : i32
    %c0_i32_1 = arith.constant 0 : i32
    return %c0_i32, %c0_i32_0 : i32, i32
  }
  func.func @transform_5(%arg0: i32) -> (i32, i32) {
    %c0_i32 = arith.constant 0 : i32
    %c0_i32_0 = arith.constant 0 : i32
    %c0_i32_1 = arith.constant 0 : i32
    return %c0_i32, %c0_i32_0 : i32, i32
  }
  func.func @transform_6(%arg0: i32) -> (i32, i32) {
    %c0_i32 = arith.constant 0 : i32
    %c0_i32_0 = arith.constant 0 : i32
    %c0_i32_1 = arith.constant 0 : i32
    return %c0_i32, %c0_i32_0 : i32, i32
  }
  func.func @transform_7(%arg0: i32) -> (i32, i32) {
    %c0_i32 = arith.constant 0 : i32
    %c0_i32_0 = arith.constant 0 : i32
    return %arg0, %c0_i32 : i32, i32
  }
}

</mosaic_0001>

<llo_original>
// kernel: tpu_custom_call.1
$region0: #{tpu_custom_call.1}
  #allocation0 [shape = 'u32[]', space=smem, size = 0x4, offset = 0x4, fixed_abs, tag = 'smem constant byte address 0x4 - core index']
  #allocation1 [shape = 'u32[72,128]{1,0:T(1,128)}', space=vmem, size = 0x9000, scoped, tag = 'internal scratch']
  %s0 = inlined_call_operand.hbm [shape: f32[8,16], index: 0, kind: input, shape index: {}]
  %s1 = inlined_call_operand.hbm [shape: f32[8,8], index: 1, kind: input, shape index: {}]
  %s2 = inlined_call_operand.hbm [shape: f32[16,32], index: 2, kind: input, shape index: {}]
  %s3 = inlined_call_operand.hbm [shape: f32[8,32], index: 3, kind: input, shape index: {}]
  %s4 = inlined_call_operand.hbm [shape: f32[32,32], index: 4, kind: input, shape index: {}]
  %s5 = inlined_call_operand.vmem [shape: f32[1,32], index: 5, kind: input, shape index: {}]
  %s6 = inlined_call_operand.vmem [shape: f32[3,32], index: 6, kind: input, shape index: {}]
  %s7 = inlined_call_operand.vmem [shape: f32[8,1], index: 7, kind: output, shape index: {}]
  %s8 = sld [smem:[#allocation0]]
  $region58: #{tpu_custom_call.1} parent=0
    _
  %s10 = ssub.s32 1, %s8
  %s11 = scalar_select 0, %s10, %s8
  $region1: #{tpu_custom_call.1} parent=0
    #allocation2 [shape = 'u8[4096]{0}', space=vmem, size = 0x1000, scoped, tag = 'input window, operand 0, single buffered']
    #allocation3 [shape = 's32[1]{0}', space=sflag, size = 0x4, scoped, tag = 'scoped memory for tpu_custom_call.1']
    #allocation4 [shape = 'u8[4096]{0}', space=vmem, size = 0x1000, scoped, tag = 'input window, operand 1, single buffered']
    #allocation5 [shape = 's32[1]{0}', space=sflag, size = 0x4, scoped, tag = 'scoped memory for tpu_custom_call.1']
    #allocation6 [shape = 'u8[8192]{0}', space=vmem, size = 0x2000, scoped, tag = 'input window, operand 2, single buffered']
    #allocation7 [shape = 'u8[4096]{0}', space=vmem, size = 0x1000, scoped, tag = 'input window, operand 3, single buffered']
    #allocation8 [shape = 's32[1]{0}', space=sflag, size = 0x4, scoped, tag = 'scoped memory for tpu_custom_call.1']
    #allocation9 [shape = 'u8[16384]{0}', space=vmem, size = 0x4000, scoped, tag = 'input window, operand 4, single buffered']
    %12 = vsyncpa [#allocation3], 0
    %13 = vsyncpa [#allocation5], 0
    %14 = vsyncpa [#allocation8], 0
    // Predicated region
    $region2: #{tpu_custom_call.1} parent=1 // pred_check
      _
    $region3: #{tpu_custom_call.1} parent=1 // pred_check_branch
      %16 = sbr.rel (0) target = $region5
    $region4: #{tpu_custom_call.1} parent=1 // pred_region
      %18 = vsyncadd [#allocation3], 0
      %s20 = sshll.u32 %s0, 4
      %s21 = int_to_ptr.hbm [resolvable:$true] %s20
      %s22 = sshll.u32 [#allocation2], 4
      %s23 = int_to_ptr.vmem [resolvable:$true] %s22
      %25 = dma.hbm_to_vmem [thread:$0]  %s21, 128, %s23, [#allocation3]
    $region5: #{tpu_custom_call.1} parent=1 // pred_fallthru
      _
    // Predicated region
    $region6: #{tpu_custom_call.1} parent=1 // pred_check
      _
    $region7: #{tpu_custom_call.1} parent=1 // pred_check_branch
      %27 = sbr.rel (0) target = $region9
    $region8: #{tpu_custom_call.1} parent=1 // pred_region
      %29 = vsyncadd [#allocation5], 0
      %s31 = sshll.u32 %s1, 4
      %s32 = int_to_ptr.hbm [resolvable:$true] %s31
      %s33 = sshll.u32 [#allocation4], 4
      %s34 = int_to_ptr.vmem [resolvable:$true] %s33
      %36 = dma.hbm_to_vmem [thread:$0]  %s32, 128, %s34, [#allocation5]
    $region9: #{tpu_custom_call.1} parent=1 // pred_fallthru
      _
    // Predicated region
    $region10: #{tpu_custom_call.1} parent=1 // pred_check
      _
    $region11: #{tpu_custom_call.1} parent=1 // pred_check_branch
      %38 = sbr.rel (0) target = $region13
    $region12: #{tpu_custom_call.1} parent=1 // pred_region
      %40 = vsyncadd [#allocation5], 0
      %s41 = sshll.u32 %s2, 4
      %s42 = int_to_ptr.hbm [resolvable:$true] %s41
      %s43 = sshll.u32 [#allocation6], 4
      %s44 = int_to_ptr.vmem [resolvable:$true] %s43
      %49 = dma.hbm_to_vmem [thread:$0]  %s42, 256, %s44, [#allocation5], 128, 128, 8
    $region13: #{tpu_custom_call.1} parent=1 // pred_fallthru
      _
    // Predicated region
    $region14: #{tpu_custom_call.1} parent=1 // pred_check
      _
    $region15: #{tpu_custom_call.1} parent=1 // pred_check_branch
      %51 = sbr.rel (0) target = $region17
    $region16: #{tpu_custom_call.1} parent=1 // pred_region
      %53 = vsyncadd [#allocation8], 0
      %s55 = sshll.u32 %s3, 4
      %s56 = int_to_ptr.hbm [resolvable:$true] %s55
      %s57 = sshll.u32 [#allocation7], 4
      %s58 = int_to_ptr.vmem [resolvable:$true] %s57
      %60 = dma.hbm_to_vmem [thread:$0]  %s56, 128, %s58, [#allocation8]
    $region17: #{tpu_custom_call.1} parent=1 // pred_fallthru
      _
    // Predicated region
    $region18: #{tpu_custom_call.1} parent=1 // pred_check
      _
    $region19: #{tpu_custom_call.1} parent=1 // pred_check_branch
      %62 = sbr.rel (0) target = $region21
    $region20: #{tpu_custom_call.1} parent=1 // pred_region
      %64 = vsyncadd [#allocation8], 0
      %s65 = sshll.u32 %s4, 4
      %s66 = int_to_ptr.hbm [resolvable:$true] %s65
      %s67 = sshll.u32 [#allocation9], 4
      %s68 = int_to_ptr.vmem [resolvable:$true] %s67
      %73 = dma.hbm_to_vmem [thread:$0]  %s66, 512, %s68, [#allocation8], 128, 128, 8
    $region21: #{tpu_custom_call.1} parent=1 // pred_fallthru
      _
    // Predicated region
    $region22: #{tpu_custom_call.1} parent=1 // pred_check
      _
    $region23: #{tpu_custom_call.1} parent=1 // pred_check_branch
      %75 = sbr.rel (0) target = $region25
    $region24: #{tpu_custom_call.1} parent=1 // pred_region
      _
    $region25: #{tpu_custom_call.1} parent=1 // pred_fallthru
      _
    // Predicated region
    $region26: #{tpu_custom_call.1} parent=1 // pred_check
      _
    $region27: #{tpu_custom_call.1} parent=1 // pred_check_branch
      %77 = sbr.rel (0) target = $region29
    $region28: #{tpu_custom_call.1} parent=1 // pred_region
      _
    $region29: #{tpu_custom_call.1} parent=1 // pred_fallthru
      _
    // Predicated region
    $region30: #{tpu_custom_call.1} parent=1 // pred_check
      _
    $region31: #{tpu_custom_call.1} parent=1 // pred_check_branch
      %79 = sbr.rel (0) target = $region33
    $region32: #{tpu_custom_call.1} parent=1 // pred_region
      %81 = dma.done [#allocation3], 128
    $region33: #{tpu_custom_call.1} parent=1 // pred_fallthru
      _
    // Predicated region
    $region34: #{tpu_custom_call.1} parent=1 // pred_check
      _
    $region35: #{tpu_custom_call.1} parent=1 // pred_check_branch
      %83 = sbr.rel (0) target = $region37
    $region36: #{tpu_custom_call.1} parent=1 // pred_region
      %85 = dma.done [#allocation5], 128
    $region37: #{tpu_custom_call.1} parent=1 // pred_fallthru
      _
    // Predicated region
    $region38: #{tpu_custom_call.1} parent=1 // pred_check
      _
    $region39: #{tpu_custom_call.1} parent=1 // pred_check_branch
      %87 = sbr.rel (0) target = $region41
    $region40: #{tpu_custom_call.1} parent=1 // pred_region
      %89 = dma.done [#allocation5], 256
    $region41: #{tpu_custom_call.1} parent=1 // pred_fallthru
      _
    // Predicated region
    $region42: #{tpu_custom_call.1} parent=1 // pred_check
      _
    $region43: #{tpu_custom_call.1} parent=1 // pred_check_branch
      %91 = sbr.rel (0) target = $region45
    $region44: #{tpu_custom_call.1} parent=1 // pred_region
      %93 = dma.done [#allocation8], 128
    $region45: #{tpu_custom_call.1} parent=1 // pred_fallthru
      _
    // Predicated region
    $region46: #{tpu_custom_call.1} parent=1 // pred_check
      _
    $region47: #{tpu_custom_call.1} parent=1 // pred_check_branch
      %95 = sbr.rel (0) target = $region49
    $region48: #{tpu_custom_call.1} parent=1 // pred_region
      %97 = dma.done [#allocation8], 512
    $region49: #{tpu_custom_call.1} parent=1 // pred_fallthru
      _
    %v98 = vld [vmem:[#allocation2] sm:$0xff]
    %v99 = vld [vmem:[#allocation6] sm:$0xff]
    %v100 = vld [vmem:[#allocation6 + $0x8] sm:$0xff]
    %v101 = vld [vmem:[#allocation4] sm:$0xff]
    %v102 = vld [vmem:[#allocation7] sm:$0xff]
    %vm103 = vcmask 64512
    %v105 = vsel %vm103, %v101, 0
    %107 = vmatpush.msra.mxu0 0.0
    %108 = vmatpush.msra.mxu0 0.0
    %109 = vmatpush.msra.mxu0 0.0
    %110 = vmatpush.msra.mxu0 0.0
    %111 = vmatpush.msra.mxu0 0.0
    %112 = vmatpush.msra.mxu0 0.0
    %113 = vmatpush.msra.mxu0 0.0
    %114 = vmatpush.msra.mxu0 0.0
    %115 = vmatpush.msra.mxu0 0.0
    %116 = vmatpush.msra.mxu0 0.0
    %117 = vmatpush.msra.mxu0 0.0
    %118 = vmatpush.msra.mxu0 0.0
    %119 = vmatpush.msra.mxu0 0.0
    %120 = vmatpush.msra.mxu0 0.0
    %121 = vmatpush.msra.mxu0 0.0
    %122 = vmatpush.msra.mxu0 %v102
    %123 = vmatmul.f32.gmra.mxu0 %v105
    %v124 = vpop.f32.mrf.mxu0
    %v125 = vadd.f32 0.0, %v124
    %126 = vdwg.mxu0
    %vm127 = vcmask 130048
    %v129 = vsel %vm127, %v98, 0
    %131 = vmatpush.msra.mxu0 0.0
    %132 = vmatpush.msra.mxu0 0.0
    %133 = vmatpush.msra.mxu0 0.0
    %134 = vmatpush.msra.mxu0 0.0
    %135 = vmatpush.msra.mxu0 0.0
    %136 = vmatpush.msra.mxu0 0.0
    %137 = vmatpush.msra.mxu0 0.0
    %138 = vmatpush.msra.mxu0 0.0
    %139 = vmatpush.msra.mxu0 0.0
    %140 = vmatpush.msra.mxu0 0.0
    %141 = vmatpush.msra.mxu0 0.0
    %142 = vmatpush.msra.mxu0 0.0
    %143 = vmatpush.msra.mxu0 0.0
    %144 = vmatpush.msra.mxu0 0.0
    %145 = vmatpush.msra.mxu0 %v100
    %146 = vmatpush.msra.mxu0 %v99
    %147 = vmatmul.f32.gmra.mxu0 %v129
    %v148 = vpop.f32.mrf.mxu0
    %v149 = vadd.f32 %v125, %v148
    %150 = vdwg.mxu0
    %v151 = vld [vmem:[%s6] sm:$0x1]
    %v152 = vperm.slane %v151, 0
    %v153 = vadd.f32 %v149, %v152
    %v154 = vmax.f32 %v153, 0.0
    %v155 = vld [vmem:[#allocation9] sm:$0xff]
    %v156 = vld [vmem:[#allocation9 + $0x8] sm:$0xff]
    %v157 = vld [vmem:[#allocation9 + $0x10] sm:$0xff]
    %v158 = vld [vmem:[#allocation9 + $0x18] sm:$0xff]
    %v159 = vld [vmem:[%s6 + $0x1] sm:$0x1]
    %v160 = vperm.slane %v159, 0
    %vm161 = vcmask 261120
    %v163 = vsel %vm161, %v154, 0
    %165 = vmatpush.msra.mxu0 0.0
    %166 = vmatpush.msra.mxu0 0.0
    %167 = vmatpush.msra.mxu0 0.0
    %168 = vmatpush.msra.mxu0 0.0
    %169 = vmatpush.msra.mxu0 0.0
    %170 = vmatpush.msra.mxu0 0.0
    %171 = vmatpush.msra.mxu0 0.0
    %172 = vmatpush.msra.mxu0 0.0
    %173 = vmatpush.msra.mxu0 0.0
    %174 = vmatpush.msra.mxu0 0.0
    %175 = vmatpush.msra.mxu0 0.0
    %176 = vmatpush.msra.mxu0 0.0
    %177 = vmatpush.msra.mxu0 %v158
    %178 = vmatpush.msra.mxu0 %v157
    %179 = vmatpush.msra.mxu0 %v156
    %180 = vmatpush.msra.mxu0 %v155
    %181 = vmatmul.f32.gmra.mxu0 %v163
    %v182 = vpop.f32.mrf.mxu0
    %v183 = vadd.f32 %v160, %v182
    %184 = vdwg.mxu0
    %v185 = vmax.f32 %v183, 0.0
    %v186 = vld [vmem:[%s5] sm:$0x1]
    %v188 = vperm.slane %v186, 0
    %v190 = vmul.f32 %v185, %v188
    %v191 = vsel %vm161, %v190, 0.0
    %192 = vadd.xlane.f32.xlu0 %v191
    %v193 = vpop.xlane.xlu0 %192
    %v194 = vld [vmem:[%s6 + $0x2] sm:$0x1]
    %v195 = vperm.slane %v194, 0
    %v196 = vadd.f32 %v193, %v195
    %vm197 = vcmask 7168
    %198 = vst.msk [vmem:[%s7] sm:$0xff] %vm197, %v196
    // Predicated region
    $region50: #{tpu_custom_call.1} parent=1 // pred_check
      _
    $region51: #{tpu_custom_call.1} parent=1 // pred_check_branch
      %200 = sbr.rel (0) target = $region53
    $region52: #{tpu_custom_call.1} parent=1 // pred_region
      _
    $region53: #{tpu_custom_call.1} parent=1 // pred_fallthru
      _
    // Predicated region
    $region54: #{tpu_custom_call.1} parent=1 // pred_check
      _
    $region55: #{tpu_custom_call.1} parent=1 // pred_check_branch
      %202 = sbr.rel (0) target = $region57
    $region56: #{tpu_custom_call.1} parent=1 // pred_region
      _
    $region57: #{tpu_custom_call.1} parent=1 // pred_fallthru
      _
    %203 = vsyncpa [#allocation3], 1
    %204 = vsyncpa [#allocation5], 1
    %205 = vsyncpa [#allocation8], 1

</llo_original>
